<compile_context>
chip_gen: v7x
topology: tpu7x:2x2x1
jax: 0.10.0
libtpu: 0.0.40
codegen_flags: <defaults>
</compile_context>

<pallas_src>
import jax
import jax.numpy as jnp
from jax.experimental import pallas as pl
from jax.experimental.pallas import tpu as pltpu

LEAKY_SLOPE = 0.01  # PyTorch nn.LeakyReLU default


def _round_up(x, m):
    return ((x + m - 1) // m) * m


def comm_kernel(obs_ref, w1_ref, b1_ref, w2_ref, b2_ref, out_ref):
    # obs_ref : (TB, IN)      native obs dtype (f32 or bf16), streamed per step
    # w1_ref  : (IN, HID_P)   compute dtype, W1^T zero-padded to 128 lanes (grid-invariant)
    # b1_ref  : (1, HID_P)    f32 (grid-invariant)
    # w2_ref  : (HID_P, HID)  compute dtype, W2^T (grid-invariant, true output width)
    # b2_ref  : (1, HID)      f32 (grid-invariant)
    # out_ref : (TB, HID)     obs dtype, true (unpadded) output width
    x = obs_ref[...].astype(w1_ref.dtype)                       # in-kernel cast (free)
    h = jnp.dot(x, w1_ref[...], preferred_element_type=jnp.float32)
    h = h + b1_ref[...]                                         # bias in f32 (VPU)
    h = jnp.maximum(h, LEAKY_SLOPE * h)                         # LeakyReLU in f32
    # Keep h in f32 for the second matmul (operand-only quantization when bf16 weights).
    o = jnp.dot(h, w2_ref[...].astype(jnp.float32),
                preferred_element_type=jnp.float32)
    o = o + b2_ref[...]
    out_ref[...] = o.astype(out_ref.dtype)


def pack_comm_params(w1, b1, w2, b2, *, compute_dtype=jnp.float32):
    """One-time repack of PyTorch-layout parameters for the kernel.

    w1: (hid, in_dim), b1: (hid,), w2: (hid, hid), b2: (hid,)  (PyTorch (out, in) layout)
    Returns padded/transposed operands; call once at load/update time, not per forward.
    """
    hid, in_dim = w1.shape
    hid_p = _round_up(hid, 128)   # hidden layer lane-dense; never hits HBM per-row
    w1_t = jnp.zeros((in_dim, hid_p), compute_dtype).at[:, :hid].set(
        w1.T.astype(compute_dtype))
    b1_p = jnp.zeros((1, hid_p), jnp.float32).at[0, :hid].set(b1.astype(jnp.float32))
    w2_t = jnp.zeros((hid_p, hid), compute_dtype).at[:hid, :].set(
        w2.T.astype(compute_dtype))
    b2_p = b2.astype(jnp.float32).reshape(1, hid)
    return {"w1_t": w1_t, "b1": b1_p, "w2_t": w2_t, "b2": b2_p}


def comm_forward(obs, params, *, tile_b=2048):
    """Comm.forward as a single fused Pallas kernel.

    obs    : (B, in_dim), in_dim = m_space * n_agents, streamed at its native dtype.
    params : output of pack_comm_params (weights may be f32 or bf16; accumulation,
             bias and LeakyReLU are always f32).  Output dtype == obs.dtype.
    """
    B, in_dim = obs.shape
    w1_t, b1_p, w2_t, b2_p = params["w1_t"], params["b1"], params["w2_t"], params["b2"]
    hid_p, hid = w2_t.shape
    assert w1_t.shape == (in_dim, hid_p), "params do not match obs feature dim"
    out_dtype = obs.dtype

    obs_b = obs.dtype.itemsize
    out_b = jnp.dtype(out_dtype).itemsize if hasattr(jnp, "dtype") else 4
    out_b = jnp.zeros((), out_dtype).dtype.itemsize
    c_b = w1_t.dtype.itemsize

    # ---- batch tiling ----------------------------------------------------------
    # Double-buffer only the streamed obs/out tiles; f32 intermediates (h, post-ReLU)
    # counted once; grid-invariant weights/biases subtracted as a fixed cost.
    fixed = 2 * (in_dim * hid_p + hid_p * hid) * c_b + 2 * (hid_p + hid) * 4
    per_row = 2 * in_dim * obs_b + 2 * hid * out_b + 2 * hid_p * 4
    vmem_budget = 24 * 1024 * 1024          # inside 32 MiB scoped default (v5e/v6e/v7x)
    max_tb = max(8, (((vmem_budget - fixed) // per_row) // 8) * 8)
    tb = min(int(tile_b), max_tb)
    if B <= tb:
        # Small batch: keep >= 2 grid steps when possible so both v7x TCs get work.
        tb = _round_up(pl.cdiv(B, 2), 8) if B >= 16 else B
    grid = (pl.cdiv(B, tb),)

    cost = pl.CostEstimate(
        flops=2 * B * in_dim * hid_p + 2 * B * hid_p * hid,
        transcendentals=0,
        bytes_accessed=(B * in_dim * obs_b            # obs in
                        + in_dim * hid_p * c_b        # W1^T
                        + hid_p * hid * c_b           # W2^T
                        + (hid_p + hid) * 4           # biases
                        + B * hid * out_b),           # out (true width)
    )

    return pl.pallas_call(
        comm_kernel,
        out_shape=jax.ShapeDtypeStruct((B, hid), out_dtype),
        grid_spec=pltpu.PrefetchScalarGridSpec(
            num_scalar_prefetch=0,
            grid=grid,
            in_specs=[
                pl.BlockSpec((tb, in_dim), lambda i: (i, 0)),    # obs tile (streamed)
                pl.BlockSpec((in_dim, hid_p), lambda i: (0, 0)),  # W1^T (grid-invariant)
                pl.BlockSpec((1, hid_p), lambda i: (0, 0)),       # b1
                pl.BlockSpec((hid_p, hid), lambda i: (0, 0)),     # W2^T (grid-invariant)
                pl.BlockSpec((1, hid), lambda i: (0, 0)),         # b2
            ],
            out_specs=pl.BlockSpec((tb, hid), lambda i: (i, 0)),  # true-width output
        ),
        compiler_params=pltpu.CompilerParams(
            dimension_semantics=("parallel",),    # batch axis shards across v7x's 2 TCs
        ),
        cost_estimate=cost,
    )(obs, w1_t, b1_p, w2_t, b2_p)


if __name__ == "__main__":
    # Config: m_space = 32, n_agents = 4  ->  in_dim = 128, hidden/out = 32
    m_space, n_agents = 32, 4
    in_dim = m_space * n_agents

    key = jax.random.PRNGKey(0)
    k_obs, k_w1, k_b1, k_w2, k_b2, k_obs2 = jax.random.split(key, 6)

    # Deterministic PyTorch-like init, stored in PyTorch (out, in) layout.
    bound1 = 1.0 / jnp.sqrt(in_dim)
    bound2 = 1.0 / jnp.sqrt(m_space)
    w1 = jax.random.uniform(k_w1, (m_space, in_dim), jnp.float32, -bound1, bound1)
    b1 = jax.random.uniform(k_b1, (m_space,), jnp.float32, -bound1, bound1)
    w2 = jax.random.uniform(k_w2, (m_space, m_space), jnp.float32, -bound2, bound2)
    b2 = jax.random.uniform(k_b2, (m_space,), jnp.float32, -bound2, bound2)

    def ref_fn(o):
        h = o @ w1.T + b1
        h = jnp.where(h > 0, h, LEAKY_SLOPE * h)
        return h @ w2.T + b2

    # Pack parameters ONCE (hoisted out of the per-call path).
    params_f32 = pack_comm_params(w1, b1, w2, b2, compute_dtype=jnp.float32)
    params_bf16 = pack_comm_params(w1, b1, w2, b2, compute_dtype=jnp.bfloat16)

    # f32 path, small batch (single grid step) — exactness check.
    obs8 = jax.random.normal(k_obs, (8, in_dim), dtype=jnp.float32)
    out8 = jax.block_until_ready(comm_forward(obs8, params_f32))
    assert out8.shape == (8, m_space)
    assert jnp.allclose(out8, ref_fn(obs8), atol=1e-5, rtol=1e-5), "f32 small-batch mismatch"

    # f32 path, ragged batch (2 grid steps + masked tail block).
    obs200 = jax.random.normal(k_obs2, (200, in_dim), dtype=jnp.float32)
    out200 = jax.block_until_ready(comm_forward(obs200, params_f32))
    assert out200.shape == (200, m_space)
    assert jnp.allclose(out200, ref_fn(obs200), atol=1e-5, rtol=1e-5), "f32 ragged mismatch"

    # bf16 weight/operand path (operand-only quantization; h kept in f32).
    out_bf16 = jax.block_until_ready(comm_forward(obs200, params_bf16))
    assert jnp.allclose(out_bf16, ref_fn(obs200), atol=3e-2, rtol=3e-2), "bf16 mismatch"

    print("KERNEL_OK")
</pallas_src>

<mosaic_0001>
module attributes {stable_mosaic.version = 11 : i64} {
  func.func @comm_kernel(%arg0: i32, %arg1: memref<8x128xf32, #tpu.memory_space<vmem>>, %arg2: memref<128x128xf32, #tpu.memory_space<vmem>>, %arg3: memref<1x128xf32, #tpu.memory_space<vmem>>, %arg4: memref<128x32xf32, #tpu.memory_space<vmem>>, %arg5: memref<1x32xf32, #tpu.memory_space<vmem>>, %arg6: memref<8x32xf32, #tpu.memory_space<vmem>>) attributes {dimension_semantics = [#tpu.dimension_semantics<parallel>], iteration_bounds = array<i64: 1>, scalar_prefetch = 0 : i64, scratch_operands = 0 : i64, tpu.core_type = #tpu.core_type<tc>, window_params = [{transform_indices = @transform_0, window_bounds = array<i64: 8, 128>}, {pipeline_mode = #tpu.pipeline_mode<synchronous>, transform_indices = @transform_1, window_bounds = array<i64: 128, 128>}, {pipeline_mode = #tpu.pipeline_mode<synchronous>, transform_indices = @transform_2, window_bounds = array<i64: 1, 128>}, {pipeline_mode = #tpu.pipeline_mode<synchronous>, transform_indices = @transform_3, window_bounds = array<i64: 128, 32>}, {pipeline_mode = #tpu.pipeline_mode<synchronous>, transform_indices = @transform_4, window_bounds = array<i64: 1, 32>}, {transform_indices = @transform_5, window_bounds = array<i64: 8, 32>}]} {
    %c0 = arith.constant 0 : index
    %c0_0 = arith.constant 0 : index
    %0 = vector.load %arg1[%c0, %c0_0] : memref<8x128xf32, #tpu.memory_space<vmem>>, vector<8x128xf32>
    %c0_1 = arith.constant 0 : index
    %c0_2 = arith.constant 0 : index
    %1 = vector.load %arg2[%c0_1, %c0_2] : memref<128x128xf32, #tpu.memory_space<vmem>>, vector<128x128xf32>
    %cst = arith.constant dense<0.000000e+00> : vector<8x128xf32>
    %2 = tpu.matmul %0, %1, %cst {dimension_numbers = #tpu.dot_dimension_numbers<[1], [0], [0], [1], [0, 0, 1, 1], [], []>} : vector<8x128xf32>, vector<128x128xf32>, vector<8x128xf32> -> vector<8x128xf32>
    %c0_3 = arith.constant 0 : index
    %c0_4 = arith.constant 0 : index
    %3 = vector.load %arg3[%c0_3, %c0_4] : memref<1x128xf32, #tpu.memory_space<vmem>>, vector<1x128xf32>
    %4 = vector.broadcast %3 : vector<1x128xf32> to vector<8x128xf32>
    %5 = arith.addf %2, %4 : vector<8x128xf32>
    %cst_5 = arith.constant 0.00999999977 : f32
    %6 = vector.broadcast %cst_5 : f32 to vector<8x128xf32>
    %7 = arith.mulf %6, %5 : vector<8x128xf32>
    %8 = arith.maximumf %5, %7 : vector<8x128xf32>
    %c0_6 = arith.constant 0 : index
    %c0_7 = arith.constant 0 : index
    %9 = vector.load %arg4[%c0_6, %c0_7] : memref<128x32xf32, #tpu.memory_space<vmem>>, vector<128x32xf32>
    %cst_8 = arith.constant dense<0.000000e+00> : vector<8x32xf32>
    %10 = tpu.matmul %8, %9, %cst_8 {dimension_numbers = #tpu.dot_dimension_numbers<[1], [0], [0], [1], [0, 0, 1, 1], [], []>} : vector<8x128xf32>, vector<128x32xf32>, vector<8x32xf32> -> vector<8x32xf32>
    %c0_9 = arith.constant 0 : index
    %c0_10 = arith.constant 0 : index
    %11 = vector.load %arg5[%c0_9, %c0_10] : memref<1x32xf32, #tpu.memory_space<vmem>>, vector<1x32xf32>
    %12 = vector.broadcast %11 : vector<1x32xf32> to vector<8x32xf32>
    %13 = arith.addf %10, %12 : vector<8x32xf32>
    %c0_11 = arith.constant 0 : index
    %c0_12 = arith.constant 0 : index
    %14 = vector.load %arg6[%c0_11, %c0_12] : memref<8x32xf32, #tpu.memory_space<vmem>>, vector<8x32xf32>
    tpu.vector_store %arg6[%c0_11, %c0_12], %13 {strides = array<i32>} : memref<8x32xf32, #tpu.memory_space<vmem>>, vector<8x32xf32>,
    return
  }
  func.func @transform_0(%arg0: i32) -> (i32, i32) {
    %c0_i32 = arith.constant 0 : i32
    %c0_i32_0 = arith.constant 0 : i32
    return %arg0, %c0_i32 : i32, i32
  }
  func.func @transform_1(%arg0: i32) -> (i32, i32) {
    %c0_i32 = arith.constant 0 : i32
    %c0_i32_0 = arith.constant 0 : i32
    %c0_i32_1 = arith.constant 0 : i32
    return %c0_i32, %c0_i32_0 : i32, i32
  }
  func.func @transform_2(%arg0: i32) -> (i32, i32) {
    %c0_i32 = arith.constant 0 : i32
    %c0_i32_0 = arith.constant 0 : i32
    %c0_i32_1 = arith.constant 0 : i32
    return %c0_i32, %c0_i32_0 : i32, i32
  }
  func.func @transform_3(%arg0: i32) -> (i32, i32) {
    %c0_i32 = arith.constant 0 : i32
    %c0_i32_0 = arith.constant 0 : i32
    %c0_i32_1 = arith.constant 0 : i32
    return %c0_i32, %c0_i32_0 : i32, i32
  }
  func.func @transform_4(%arg0: i32) -> (i32, i32) {
    %c0_i32 = arith.constant 0 : i32
    %c0_i32_0 = arith.constant 0 : i32
    %c0_i32_1 = arith.constant 0 : i32
    return %c0_i32, %c0_i32_0 : i32, i32
  }
  func.func @transform_5(%arg0: i32) -> (i32, i32) {
    %c0_i32 = arith.constant 0 : i32
    %c0_i32_0 = arith.constant 0 : i32
    return %arg0, %c0_i32 : i32, i32
  }
}

</mosaic_0001>

<llo_original>
// kernel: tpu_custom_call.1
$region0: #{tpu_custom_call.1}
  #allocation0 [shape = 'u32[]', space=smem, size = 0x4, offset = 0x4, fixed_abs, tag = 'smem constant byte address 0x4 - core index']
  #allocation1 [shape = 'u32[144,128]{1,0:T(1,128)}', space=vmem, size = 0x12000, scoped, tag = 'internal scratch']
  %s0 = inlined_call_operand.vmem [shape: f32[8,128], index: 0, kind: input, shape index: {}]
  %s1 = inlined_call_operand.vmem [shape: f32[128,128], index: 1, kind: input, shape index: {}]
  %s2 = inlined_call_operand.vmem [shape: f32[1,128], index: 2, kind: input, shape index: {}]
  %s3 = inlined_call_operand.vmem [shape: f32[128,32], index: 3, kind: input, shape index: {}]
  %s4 = inlined_call_operand.vmem [shape: f32[1,32], index: 4, kind: input, shape index: {}]
  %s5 = inlined_call_operand.hbm [shape: f32[8,32], index: 5, kind: output, shape index: {}]
  %s6 = sld [smem:[#allocation0]]
  $region30: #{tpu_custom_call.1} parent=0
    _
  %s8 = ssub.s32 1, %s6
  %s9 = scalar_select 0, %s8, %s6
  $region1: #{tpu_custom_call.1} parent=0
    #allocation2 [shape = 'u8[4096]{0}', space=vmem, size = 0x1000, scoped, tag = 'output window, operand 0, single buffered']
    #allocation3 [shape = 's32[1]{0}', space=sflag, size = 0x4, scoped, tag = 'scoped memory for tpu_custom_call.1']
    %10 = vsyncpa [#allocation3], 0
    // Predicated region
    $region2: #{tpu_custom_call.1} parent=1 // pred_check
      _
    $region3: #{tpu_custom_call.1} parent=1 // pred_check_branch
      %12 = sbr.rel (0) target = $region5
    $region4: #{tpu_custom_call.1} parent=1 // pred_region
      _
    $region5: #{tpu_custom_call.1} parent=1 // pred_fallthru
      _
    // Predicated region
    $region6: #{tpu_custom_call.1} parent=1 // pred_check
      _
    $region7: #{tpu_custom_call.1} parent=1 // pred_check_branch
      %14 = sbr.rel (0) target = $region9
    $region8: #{tpu_custom_call.1} parent=1 // pred_region
      _
    $region9: #{tpu_custom_call.1} parent=1 // pred_fallthru
      _
    // Predicated region
    $region10: #{tpu_custom_call.1} parent=1 // pred_check
      _
    $region11: #{tpu_custom_call.1} parent=1 // pred_check_branch
      %16 = sbr.rel (0) target = $region13
    $region12: #{tpu_custom_call.1} parent=1 // pred_region
      _
    $region13: #{tpu_custom_call.1} parent=1 // pred_fallthru
      _
    // Predicated region
    $region14: #{tpu_custom_call.1} parent=1 // pred_check
      _
    $region15: #{tpu_custom_call.1} parent=1 // pred_check_branch
      %18 = sbr.rel (0) target = $region17
    $region16: #{tpu_custom_call.1} parent=1 // pred_region
      _
    $region17: #{tpu_custom_call.1} parent=1 // pred_fallthru
      _
    // Predicated region
    $region18: #{tpu_custom_call.1} parent=1 // pred_check
      _
    $region19: #{tpu_custom_call.1} parent=1 // pred_check_branch
      %20 = sbr.rel (0) target = $region21
    $region20: #{tpu_custom_call.1} parent=1 // pred_region
      _
    $region21: #{tpu_custom_call.1} parent=1 // pred_fallthru
      _
    %v21 = vld [vmem:[%s0] sm:$0xff]
    %v22 = vld [vmem:[%s1] sm:$0xff]
    %v23 = vld [vmem:[%s1 + $0x8] sm:$0xff]
    %v24 = vld [vmem:[%s1 + $0x10] sm:$0xff]
    %v25 = vld [vmem:[%s1 + $0x18] sm:$0xff]
    %v26 = vld [vmem:[%s1 + $0x20] sm:$0xff]
    %v27 = vld [vmem:[%s1 + $0x28] sm:$0xff]
    %v28 = vld [vmem:[%s1 + $0x30] sm:$0xff]
    %v29 = vld [vmem:[%s1 + $0x38] sm:$0xff]
    %v30 = vld [vmem:[%s1 + $0x40] sm:$0xff]
    %v31 = vld [vmem:[%s1 + $0x48] sm:$0xff]
    %v32 = vld [vmem:[%s1 + $0x50] sm:$0xff]
    %v33 = vld [vmem:[%s1 + $0x58] sm:$0xff]
    %v34 = vld [vmem:[%s1 + $0x60] sm:$0xff]
    %v35 = vld [vmem:[%s1 + $0x68] sm:$0xff]
    %v36 = vld [vmem:[%s1 + $0x70] sm:$0xff]
    %v37 = vld [vmem:[%s1 + $0x78] sm:$0xff]
    %v38 = vld [vmem:[%s2] sm:$0x1]
    %v40 = vlaneseq
    %v41 = vshrl.u32 %v40, 7
    %v42 = vsub.s32 0, %v41
    %v43 = vrot.slane %v38, %v42
    %45 = vmatprep.subr.mxu0 0.0
    %46 = vmatpush1.msra.mxu0 %v22
    %47 = vmatprep.subr.mxu0 0.0
    %48 = vmatpush1.msra.mxu0 %v23
    %49 = vmatprep.subr.mxu0 0.0
    %50 = vmatpush1.msra.mxu0 %v24
    %51 = vmatprep.subr.mxu0 0.0
    %52 = vmatpush1.msra.mxu0 %v25
    %53 = vmatprep.subr.mxu0 0.0
    %54 = vmatpush1.msra.mxu0 %v26
    %55 = vmatprep.subr.mxu0 0.0
    %56 = vmatpush1.msra.mxu0 %v27
    %57 = vmatprep.subr.mxu0 0.0
    %58 = vmatpush1.msra.mxu0 %v28
    %59 = vmatprep.subr.mxu0 0.0
    %60 = vmatpush1.msra.mxu0 %v29
    %61 = vmatprep.subr.mxu0 0.0
    %62 = vmatpush1.msra.mxu0 %v30
    %63 = vmatprep.subr.mxu0 0.0
    %64 = vmatpush1.msra.mxu0 %v31
    %65 = vmatprep.subr.mxu0 0.0
    %66 = vmatpush1.msra.mxu0 %v32
    %67 = vmatprep.subr.mxu0 0.0
    %68 = vmatpush1.msra.mxu0 %v33
    %69 = vmatprep.subr.mxu0 0.0
    %70 = vmatpush1.msra.mxu0 %v34
    %71 = vmatprep.subr.mxu0 0.0
    %72 = vmatpush1.msra.mxu0 %v35
    %73 = vmatprep.subr.mxu0 0.0
    %74 = vmatpush1.msra.mxu0 %v36
    %75 = vmatprep.subr.mxu0 0.0
    %76 = vmatpush1.msra.mxu0 %v37
    %77 = vmatprep.subr.mxu0 0.0
    %78 = vmatpush1.msra.mxu0 0.0
    %79 = vmatprep.subr.mxu0 0.0
    %80 = vmatpush1.msra.mxu0 0.0
    %81 = vmatprep.subr.mxu0 0.0
    %82 = vmatpush1.msra.mxu0 0.0
    %83 = vmatprep.subr.mxu0 0.0
    %84 = vmatpush1.msra.mxu0 0.0
    %85 = vmatprep.subr.mxu0 0.0
    %86 = vmatpush1.msra.mxu0 0.0
    %87 = vmatprep.subr.mxu0 0.0
    %88 = vmatpush1.msra.mxu0 0.0
    %89 = vmatprep.subr.mxu0 0.0
    %90 = vmatpush1.msra.mxu0 0.0
    %91 = vmatprep.subr.mxu0 0.0
    %92 = vmatpush1.msra.mxu0 0.0
    %93 = vmatprep.subr.mxu0 0.0
    %94 = vmatpush1.msra.mxu0 0.0
    %95 = vmatprep.subr.mxu0 0.0
    %96 = vmatpush1.msra.mxu0 0.0
    %97 = vmatprep.subr.mxu0 0.0
    %98 = vmatpush1.msra.mxu0 0.0
    %99 = vmatprep.subr.mxu0 0.0
    %100 = vmatpush1.msra.mxu0 0.0
    %101 = vmatprep.subr.mxu0 0.0
    %102 = vmatpush1.msra.mxu0 0.0
    %103 = vmatprep.subr.mxu0 0.0
    %104 = vmatpush1.msra.mxu0 0.0
    %105 = vmatprep.subr.mxu0 0.0
    %106 = vmatpush1.msra.mxu0 0.0
    %107 = vmatprep.subr.mxu0 0.0
    %108 = vmatpush1.msra.mxu0 0.0
    %109 = vmatprep.mubr.f32.mxu0 0.0
    %110 = vmatmul.mubr.f32.gmra.mrb[0].mxu0 %v21
    %v111 = vpop.f32.mrb[0].mxu0
    %v112 = vadd.f32 %v43, %v111
    %v113 = vpop.f32.mrb[0].mxu0
    %114 = vdwg.mxu0
    %v115 = vmul.f32 %v112, 0.01
    %v116 = vmax.f32 %v112, %v115
    %v117 = vld [vmem:[%s3] sm:$0xff]
    %v118 = vld [vmem:[%s3 + $0x8] sm:$0xff]
    %v119 = vld [vmem:[%s3 + $0x10] sm:$0xff]
    %v120 = vld [vmem:[%s3 + $0x18] sm:$0xff]
    %v121 = vld [vmem:[%s3 + $0x20] sm:$0xff]
    %v122 = vld [vmem:[%s3 + $0x28] sm:$0xff]
    %v123 = vld [vmem:[%s3 + $0x30] sm:$0xff]
    %v124 = vld [vmem:[%s3 + $0x38] sm:$0xff]
    %v125 = vld [vmem:[%s3 + $0x40] sm:$0xff]
    %v126 = vld [vmem:[%s3 + $0x48] sm:$0xff]
    %v127 = vld [vmem:[%s3 + $0x50] sm:$0xff]
    %v128 = vld [vmem:[%s3 + $0x58] sm:$0xff]
    %v129 = vld [vmem:[%s3 + $0x60] sm:$0xff]
    %v130 = vld [vmem:[%s3 + $0x68] sm:$0xff]
    %v131 = vld [vmem:[%s3 + $0x70] sm:$0xff]
    %v132 = vld [vmem:[%s3 + $0x78] sm:$0xff]
    %v133 = vld [vmem:[%s4] sm:$0x1]
    %v135 = vlaneseq
    %v136 = vshrl.u32 %v135, 7
    %v137 = vsub.s32 0, %v136
    %v138 = vrot.slane %v133, %v137
    %140 = vmatprep.subr.mxu0 0.0
    %141 = vmatpush1.msra.mxu0 %v117
    %142 = vmatprep.subr.mxu0 0.0
    %143 = vmatpush1.msra.mxu0 %v118
    %144 = vmatprep.subr.mxu0 0.0
    %145 = vmatpush1.msra.mxu0 %v119
    %146 = vmatprep.subr.mxu0 0.0
    %147 = vmatpush1.msra.mxu0 %v120
    %148 = vmatprep.subr.mxu0 0.0
    %149 = vmatpush1.msra.mxu0 %v121
    %150 = vmatprep.subr.mxu0 0.0
    %151 = vmatpush1.msra.mxu0 %v122
    %152 = vmatprep.subr.mxu0 0.0
    %153 = vmatpush1.msra.mxu0 %v123
    %154 = vmatprep.subr.mxu0 0.0
    %155 = vmatpush1.msra.mxu0 %v124
    %156 = vmatprep.subr.mxu0 0.0
    %157 = vmatpush1.msra.mxu0 %v125
    %158 = vmatprep.subr.mxu0 0.0
    %159 = vmatpush1.msra.mxu0 %v126
    %160 = vmatprep.subr.mxu0 0.0
    %161 = vmatpush1.msra.mxu0 %v127
    %162 = vmatprep.subr.mxu0 0.0
    %163 = vmatpush1.msra.mxu0 %v128
    %164 = vmatprep.subr.mxu0 0.0
    %165 = vmatpush1.msra.mxu0 %v129
    %166 = vmatprep.subr.mxu0 0.0
    %167 = vmatpush1.msra.mxu0 %v130
    %168 = vmatprep.subr.mxu0 0.0
    %169 = vmatpush1.msra.mxu0 %v131
    %170 = vmatprep.subr.mxu0 0.0
    %171 = vmatpush1.msra.mxu0 %v132
    %172 = vmatprep.subr.mxu0 0.0
    %173 = vmatpush1.msra.mxu0 0.0
    %174 = vmatprep.subr.mxu0 0.0
    %175 = vmatpush1.msra.mxu0 0.0
    %176 = vmatprep.subr.mxu0 0.0
    %177 = vmatpush1.msra.mxu0 0.0
    %178 = vmatprep.subr.mxu0 0.0
    %179 = vmatpush1.msra.mxu0 0.0
    %180 = vmatprep.subr.mxu0 0.0
    %181 = vmatpush1.msra.mxu0 0.0
    %182 = vmatprep.subr.mxu0 0.0
    %183 = vmatpush1.msra.mxu0 0.0
    %184 = vmatprep.subr.mxu0 0.0
    %185 = vmatpush1.msra.mxu0 0.0
    %186 = vmatprep.subr.mxu0 0.0
    %187 = vmatpush1.msra.mxu0 0.0
    %188 = vmatprep.subr.mxu0 0.0
    %189 = vmatpush1.msra.mxu0 0.0
    %190 = vmatprep.subr.mxu0 0.0
    %191 = vmatpush1.msra.mxu0 0.0
    %192 = vmatprep.subr.mxu0 0.0
    %193 = vmatpush1.msra.mxu0 0.0
    %194 = vmatprep.subr.mxu0 0.0
    %195 = vmatpush1.msra.mxu0 0.0
    %196 = vmatprep.subr.mxu0 0.0
    %197 = vmatpush1.msra.mxu0 0.0
    %198 = vmatprep.subr.mxu0 0.0
    %199 = vmatpush1.msra.mxu0 0.0
    %200 = vmatprep.subr.mxu0 0.0
    %201 = vmatpush1.msra.mxu0 0.0
    %202 = vmatprep.subr.mxu0 0.0
    %203 = vmatpush1.msra.mxu0 0.0
    %204 = vmatprep.mubr.f32.mxu0 0.0
    %205 = vmatmul.mubr.f32.gmra.mrb[0].mxu0 %v116
    %v206 = vpop.f32.mrb[0].mxu0
    %v207 = vadd.f32 %v138, %v206
    %v208 = vpop.f32.mrb[0].mxu0
    %209 = vdwg.mxu0
    %vm210 = vcmask 261120
    %211 = vst.msk [vmem:[#allocation2] sm:$0xff] %vm210, %v207
    // Predicated region
    $region22: #{tpu_custom_call.1} parent=1 // pred_check
      _
    $region23: #{tpu_custom_call.1} parent=1 // pred_check_branch
      %213 = sbr.rel (0) target = $region25
    $region24: #{tpu_custom_call.1} parent=1 // pred_region
      %s215 = ssub.s32 128, 128
      %216 = vsyncadd [#allocation3], %s215
      %s218 = sshll.u32 [#allocation2], 4
      %s219 = int_to_ptr.vmem [resolvable:$true] %s218
      %221 = dma.vmem_to_hbm [thread:$0]  %s219, 128, %s5, [#allocation3]
    $region25: #{tpu_custom_call.1} parent=1 // pred_fallthru
      _
    // Predicated region
    $region26: #{tpu_custom_call.1} parent=1 // pred_check
      _
    $region27: #{tpu_custom_call.1} parent=1 // pred_check_branch
      %223 = sbr.rel (0) target = $region29
    $region28: #{tpu_custom_call.1} parent=1 // pred_region
      %224 = dma.done [#allocation3], 128
    $region29: #{tpu_custom_call.1} parent=1 // pred_fallthru
      _
    %225 = vsyncpa [#allocation3], 1

</llo_original>
